<compile_context>
chip_gen: v5e
topology: v5e:2x2
jax: 0.10.0
libtpu: 0.0.40
codegen_flags: <defaults>
</compile_context>

<pallas_src>
import jax
import jax.numpy as jnp
from jax.experimental import pallas as pl
from jax.experimental.pallas import tpu as pltpu

HIDDEN = 128   # multiple of 128 -> lane-aligned gate slices (orig module: 256)
VOCAB = 256    # multiple of 128 -> lane-dense logit rows
SEQ = 8        # number of fused decode steps in the demo


def decoder_rnn_kernel(toks_ref,      # SMEM (T,) int32  (scalar prefetch)
                       emb_ref,       # VMEM (V, H)       resident
                       h0_ref,        # VMEM (1, H)       resident
                       w_cat_ref,     # VMEM (H, 6H)      resident
                       b_rz_ref,      # VMEM (1, 2H)      resident
                       b_n_i_ref,     # VMEM (1, H)       resident
                       b_n_h_ref,     # VMEM (1, H)       resident
                       w_out_t_ref,   # VMEM (H, V)       resident
                       b_out_ref,     # VMEM (1, V)       resident
                       logp_ref,      # out VMEM (1, 1, V) -> row t of (T,1,V)
                       h_out_ref,     # out VMEM (1, H)    final hidden
                       xh_ref):       # scratch VMEM (2, H): row0=x, row1=h carry
    t = pl.program_id(0)
    H = h0_ref.shape[-1]
    V = emb_ref.shape[0]

    # Step 0: seed the hidden-state carry slot from the caller's hidden.
    @pl.when(t == 0)
    def _():
        xh_ref[1:2, :] = h0_ref[...]

    # Embedding lookup (token id clamped -> no unchecked OOB VMEM read),
    # view(1,1,-1) + ReLU; result becomes row 0 of the stacked (2, H) LHS.
    tok = jnp.clip(toks_ref[t], 0, V - 1)
    xh_ref[0:1, :] = jnp.maximum(emb_ref[pl.ds(tok, 1), :], 0.0)

    h = xh_ref[1:2, :]                                   # previous hidden (1, H)

    # One MXU pass covering both GRU matmuls:
    #   [x; h] (2,H) @ [W_ih^T | W_hh^T] (H,6H) -> (2,6H)
    gates = jnp.dot(xh_ref[...], w_cat_ref[...],
                    preferred_element_type=jnp.float32)
    gi = gates[0:1, 0:3 * H]            # x @ W_ih^T   (1, 3H)
    gh = gates[1:2, 3 * H:6 * H]        # h @ W_hh^T   (1, 3H)

    # PyTorch GRU cell, gate order r, z, n.  r/z use the folded bias; the
    # n-gate hidden bias stays separate because it is scaled by r.
    rz = jax.nn.sigmoid(gi[:, 0:2 * H] + gh[:, 0:2 * H] + b_rz_ref[...])
    r = rz[:, 0:H]
    z = rz[:, H:2 * H]
    n = jnp.tanh(gi[:, 2 * H:3 * H] + b_n_i_ref[...]
                 + r * (gh[:, 2 * H:3 * H] + b_n_h_ref[...]))
    h_new = (1.0 - z) * n + z * h                        # (1, H)

    xh_ref[1:2, :] = h_new          # carry to next grid step
    h_out_ref[...] = h_new          # resident output block (written back once)

    # out Linear + numerically-stable LogSoftmax(dim=1)
    logits = jnp.dot(h_new, w_out_t_ref[...],
                     preferred_element_type=jnp.float32) + b_out_ref[...]
    m = jnp.max(logits, axis=-1, keepdims=True)
    lse = jnp.log(jnp.sum(jnp.exp(logits - m), axis=-1, keepdims=True)) + m
    logp_ref[...] = (logits - lse).reshape(1, 1, V)


def decoder_rnn_decode(tokens, hidden, params):
    """Run T teacher-forced DecoderRNN forward() steps in ONE pallas_call.

    tokens: (T,) int32; hidden: (1, 1, H) float32.
    Returns (log_probs (T, V), hidden_final (1, 1, H))."""
    emb, w_cat, b_rz, b_n_i, b_n_h, w_out_t, b_out = params
    V, H = emb.shape
    toks = jnp.reshape(tokens, (-1,)).astype(jnp.int32)
    T = toks.shape[0]
    h0 = hidden.reshape(1, H)

    grid_spec = pltpu.PrefetchScalarGridSpec(
        num_scalar_prefetch=1,
        grid=(T,),
        in_specs=[
            pl.BlockSpec((V, H), lambda t, tk: (0, 0)),        # emb (resident)
            pl.BlockSpec((1, H), lambda t, tk: (0, 0)),        # h0
            pl.BlockSpec((H, 6 * H), lambda t, tk: (0, 0)),    # [W_ih^T|W_hh^T]
            pl.BlockSpec((1, 2 * H), lambda t, tk: (0, 0)),    # folded r/z bias
            pl.BlockSpec((1, H), lambda t, tk: (0, 0)),        # b_in (n gate)
            pl.BlockSpec((1, H), lambda t, tk: (0, 0)),        # b_hn (n gate)
            pl.BlockSpec((H, V), lambda t, tk: (0, 0)),        # out weight^T
            pl.BlockSpec((1, V), lambda t, tk: (0, 0)),        # out bias
        ],
        out_specs=(
            pl.BlockSpec((1, 1, V), lambda t, tk: (t, 0, 0)),  # per-step logp row
            pl.BlockSpec((1, H), lambda t, tk: (0, 0)),        # final hidden
        ),
        scratch_shapes=[pltpu.VMEM((2, H), jnp.float32)],      # [x; h] carry
    )

    # Advisory cost estimate: tiny kernel, keep XLA from over-serializing.
    flops = int(T * (2 * 2 * H * 6 * H + 2 * H * V + 12 * H + 4 * V))
    transcendentals = int(T * (3 * H + V + 2))
    bytes_accessed = int(4 * (V * H + 6 * H * H + H * V + 4 * H + 2 * V
                              + T * (V + H) + T))

    logp, h_final = pl.pallas_call(
        decoder_rnn_kernel,
        out_shape=(
            jax.ShapeDtypeStruct((T, 1, V), jnp.float32),
            jax.ShapeDtypeStruct((1, H), jnp.float32),
        ),
        grid_spec=grid_spec,
        compiler_params=pltpu.CompilerParams(
            dimension_semantics=("arbitrary",)),               # sequential carry
        cost_estimate=pl.CostEstimate(
            flops=flops, transcendentals=transcendentals,
            bytes_accessed=bytes_accessed),
    )(toks, emb, h0, w_cat, b_rz, b_n_i, b_n_h, w_out_t, b_out)

    return logp.reshape(T, V), h_final.reshape(1, 1, H)


def decoder_rnn_forward(input_tok, hidden, params):
    """Exact analogue of the PyTorch forward(input, hidden): one step."""
    logp, h_new = decoder_rnn_decode(jnp.reshape(input_tok, (1,)), hidden, params)
    return logp, h_new                 # (1, V), (1, 1, H)


def init_params(key, hidden_size, output_size):
    """PyTorch-like init: Embedding ~ N(0,1); GRU/Linear ~ U(-1/sqrt(H), 1/sqrt(H))."""
    H, V = hidden_size, output_size
    k = 1.0 / jnp.sqrt(jnp.float32(H))
    ks = jax.random.split(key, 7)
    emb = jax.random.normal(ks[0], (V, H), jnp.float32)
    w_ih = jax.random.uniform(ks[1], (3 * H, H), jnp.float32, -k, k)
    w_hh = jax.random.uniform(ks[2], (3 * H, H), jnp.float32, -k, k)
    b_ih = jax.random.uniform(ks[3], (3 * H,), jnp.float32, -k, k)
    b_hh = jax.random.uniform(ks[4], (3 * H,), jnp.float32, -k, k)
    w_out = jax.random.uniform(ks[5], (V, H), jnp.float32, -k, k)
    b_out = jax.random.uniform(ks[6], (V,), jnp.float32, -k, k)
    return emb, w_ih, w_hh, b_ih, b_hh, w_out, b_out


def pack_params(raw):
    """Repack raw PyTorch-layout params into the kernel's fused layout."""
    emb, w_ih, w_hh, b_ih, b_hh, w_out, b_out = raw
    H = emb.shape[1]
    w_cat = jnp.concatenate([w_ih.T, w_hh.T], axis=1)            # (H, 6H)
    b_rz = (b_ih[:2 * H] + b_hh[:2 * H]).reshape(1, 2 * H)       # folded
    b_n_i = b_ih[2 * H:].reshape(1, H)
    b_n_h = b_hh[2 * H:].reshape(1, H)
    return emb, w_cat, b_rz, b_n_i, b_n_h, w_out.T, b_out.reshape(1, -1)


def reference_decode(tokens, hidden, raw):
    """Pure-JAX reference (PyTorch semantics) for correctness checking."""
    emb, w_ih, w_hh, b_ih, b_hh, w_out, b_out = raw
    H = emb.shape[1]
    hp = jax.lax.Precision.HIGHEST
    h = hidden.reshape(1, H)
    rows = []
    for tok in tokens:
        x = jnp.maximum(emb[tok][None, :], 0.0)
        gi = jnp.dot(x, w_ih.T, precision=hp) + b_ih
        gh = jnp.dot(h, w_hh.T, precision=hp) + b_hh
        r = jax.nn.sigmoid(gi[:, :H] + gh[:, :H])
        z = jax.nn.sigmoid(gi[:, H:2 * H] + gh[:, H:2 * H])
        n = jnp.tanh(gi[:, 2 * H:] + r * gh[:, 2 * H:])
        h = (1.0 - z) * n + z * h
        logits = jnp.dot(h, w_out.T, precision=hp) + b_out
        rows.append(jax.nn.log_softmax(logits, axis=-1))
    return jnp.concatenate(rows, axis=0), h.reshape(1, 1, H)


if __name__ == "__main__":
    key = jax.random.PRNGKey(0)
    raw = init_params(key, HIDDEN, VOCAB)
    params = pack_params(raw)

    tokens = jax.random.randint(jax.random.fold_in(key, 1), (SEQ,), 0, VOCAB,
                                dtype=jnp.int32)
    hidden0 = jnp.zeros((1, 1, HIDDEN), jnp.float32)     # initHidden()

    # Fused T-step decode: one pallas_call for all SEQ forward() steps.
    logp, h_final = decoder_rnn_decode(tokens, hidden0, params)
    jax.block_until_ready((logp, h_final))
    assert logp.shape == (SEQ, VOCAB)
    assert h_final.shape == (1, 1, HIDDEN)

    ref_logp, ref_h = reference_decode(tokens, hidden0, raw)
    assert bool(jnp.allclose(jnp.sum(jnp.exp(logp), axis=-1), 1.0, atol=1e-3))
    assert bool(jnp.allclose(logp, ref_logp, atol=5e-2, rtol=0.0)), \
        float(jnp.max(jnp.abs(logp - ref_logp)))
    assert bool(jnp.allclose(h_final, ref_h, atol=5e-2, rtol=0.0))

    # Single-step path with the original forward(input, hidden) signature.
    logp1, h1 = decoder_rnn_forward(tokens[0:1], hidden0, params)
    jax.block_until_ready((logp1, h1))
    assert logp1.shape == (1, VOCAB) and h1.shape == (1, 1, HIDDEN)
    assert bool(jnp.allclose(logp1, ref_logp[0:1], atol=5e-2, rtol=0.0))

    print("KERNEL_OK")
</pallas_src>

<mosaic_0001>
module attributes {stable_mosaic.version = 11 : i64} {
  func.func @decoder_rnn_kernel(%arg0: i32, %arg1: memref<8xi32, #tpu.memory_space<smem>>, %arg2: memref<256x128xf32, #tpu.memory_space<vmem>>, %arg3: memref<1x128xf32, #tpu.memory_space<vmem>>, %arg4: memref<128x768xf32, #tpu.memory_space<vmem>>, %arg5: memref<1x256xf32, #tpu.memory_space<vmem>>, %arg6: memref<1x128xf32, #tpu.memory_space<vmem>>, %arg7: memref<1x128xf32, #tpu.memory_space<vmem>>, %arg8: memref<128x256xf32, #tpu.memory_space<vmem>>, %arg9: memref<1x256xf32, #tpu.memory_space<vmem>>, %arg10: memref<1x1x256xf32, #tpu.memory_space<vmem>>, %arg11: memref<1x128xf32, #tpu.memory_space<vmem>>, %arg12: memref<2x128xf32, #tpu.memory_space<vmem>>) attributes {dimension_semantics = [#tpu.dimension_semantics<arbitrary>], iteration_bounds = array<i64: 8>, scalar_prefetch = 1 : i64, scratch_operands = 1 : i64, tpu.core_type = #tpu.core_type<tc>, window_params = [{pipeline_mode = #tpu.pipeline_mode<synchronous>, transform_indices = @transform_0, window_bounds = array<i64: 256, 128>}, {pipeline_mode = #tpu.pipeline_mode<synchronous>, transform_indices = @transform_1, window_bounds = array<i64: 1, 128>}, {pipeline_mode = #tpu.pipeline_mode<synchronous>, transform_indices = @transform_2, window_bounds = array<i64: 128, 768>}, {pipeline_mode = #tpu.pipeline_mode<synchronous>, transform_indices = @transform_3, window_bounds = array<i64: 1, 256>}, {pipeline_mode = #tpu.pipeline_mode<synchronous>, transform_indices = @transform_4, window_bounds = array<i64: 1, 128>}, {pipeline_mode = #tpu.pipeline_mode<synchronous>, transform_indices = @transform_5, window_bounds = array<i64: 1, 128>}, {pipeline_mode = #tpu.pipeline_mode<synchronous>, transform_indices = @transform_6, window_bounds = array<i64: 128, 256>}, {pipeline_mode = #tpu.pipeline_mode<synchronous>, transform_indices = @transform_7, window_bounds = array<i64: 1, 256>}, {transform_indices = @transform_8, window_bounds = array<i64: 1, 1, 256>}, {pipeline_mode = #tpu.pipeline_mode<synchronous>, transform_indices = @transform_9, window_bounds = array<i64: 1, 128>}]} {
    %c0_i32 = arith.constant 0 : i32
    %0 = arith.cmpi eq, %arg0, %c0_i32 : i32
    %1 = arith.extui %0 : i1 to i32
    %c0_i32_0 = arith.constant 0 : i32
    %2 = arith.cmpi ne, %1, %c0_i32_0 : i32
    scf.if %2 {
      %c0_32 = arith.constant 0 : index
      %c0_33 = arith.constant 0 : index
      %63 = vector.load %arg3[%c0_32, %c0_33] : memref<1x128xf32, #tpu.memory_space<vmem>>, vector<1x128xf32>
      %c1_34 = arith.constant 1 : index
      %c0_35 = arith.constant 0 : index
      %64 = vector.load %arg12[%c1_34, %c0_35] : memref<2x128xf32, #tpu.memory_space<vmem>>, vector<1x128xf32>
      tpu.vector_store %arg12[%c1_34, %c0_35], %63 {strides = array<i32>} : memref<2x128xf32, #tpu.memory_space<vmem>>, vector<1x128xf32>,
    } else {
    }
    %3 = arith.index_cast %arg0 : i32 to index
    %4 = memref.load %arg1[%3] : memref<8xi32, #tpu.memory_space<smem>>
    %c0_i32_1 = arith.constant 0 : i32
    %c255_i32 = arith.constant 255 : i32
    %5 = arith.maxsi %c0_i32_1, %4 : i32
    %6 = arith.minsi %c255_i32, %5 : i32
    %7 = arith.index_cast %6 : i32 to index
    %c0 = arith.constant 0 : index
    %8 = vector.load %arg2[%7, %c0] : memref<256x128xf32, #tpu.memory_space<vmem>>, vector<1x128xf32>
    %cst = arith.constant 0.000000e+00 : f32
    %9 = vector.broadcast %cst : f32 to vector<1x128xf32>
    %10 = arith.maximumf %8, %9 : vector<1x128xf32>
    %c0_2 = arith.constant 0 : index
    %c0_3 = arith.constant 0 : index
    %11 = vector.load %arg12[%c0_2, %c0_3] : memref<2x128xf32, #tpu.memory_space<vmem>>, vector<1x128xf32>
    tpu.vector_store %arg12[%c0_2, %c0_3], %10 {strides = array<i32>} : memref<2x128xf32, #tpu.memory_space<vmem>>, vector<1x128xf32>,
    %c1 = arith.constant 1 : index
    %c0_4 = arith.constant 0 : index
    %12 = vector.load %arg12[%c1, %c0_4] : memref<2x128xf32, #tpu.memory_space<vmem>>, vector<1x128xf32>
    %c0_5 = arith.constant 0 : index
    %c0_6 = arith.constant 0 : index
    %13 = vector.load %arg12[%c0_5, %c0_6] : memref<2x128xf32, #tpu.memory_space<vmem>>, vector<2x128xf32>
    %c0_7 = arith.constant 0 : index
    %c0_8 = arith.constant 0 : index
    %14 = vector.load %arg4[%c0_7, %c0_8] : memref<128x768xf32, #tpu.memory_space<vmem>>, vector<128x768xf32>
    %cst_9 = arith.constant dense<0.000000e+00> : vector<2x768xf32>
    %15 = tpu.matmul %13, %14, %cst_9 {dimension_numbers = #tpu.dot_dimension_numbers<[1], [0], [0], [1], [0, 0, 1, 1], [], []>} : vector<2x128xf32>, vector<128x768xf32>, vector<2x768xf32> -> vector<2x768xf32>
    %16 = vector.extract_strided_slice %15 {offsets = [0, 0], sizes = [1, 384], strides = [1, 1]} : vector<2x768xf32> to vector<1x384xf32>
    %17 = vector.extract_strided_slice %15 {offsets = [1, 384], sizes = [1, 384], strides = [1, 1]} : vector<2x768xf32> to vector<1x384xf32>
    %18 = vector.extract_strided_slice %16 {offsets = [0, 0], sizes = [1, 256], strides = [1, 1]} : vector<1x384xf32> to vector<1x256xf32>
    %19 = vector.extract_strided_slice %17 {offsets = [0, 0], sizes = [1, 256], strides = [1, 1]} : vector<1x384xf32> to vector<1x256xf32>
    %20 = arith.addf %18, %19 : vector<1x256xf32>
    %c0_10 = arith.constant 0 : index
    %c0_11 = arith.constant 0 : index
    %21 = vector.load %arg5[%c0_10, %c0_11] : memref<1x256xf32, #tpu.memory_space<vmem>>, vector<1x256xf32>
    %22 = arith.addf %20, %21 : vector<1x256xf32>
    %23 = arith.negf %22 : vector<1x256xf32>
    %24 = math.exp %23 : vector<1x256xf32>
    %cst_12 = arith.constant 1.000000e+00 : f32
    %25 = vector.broadcast %cst_12 : f32 to vector<1x256xf32>
    %26 = arith.addf %25, %24 : vector<1x256xf32>
    %27 = arith.divf %25, %26 : vector<1x256xf32>
    %28 = vector.extract_strided_slice %27 {offsets = [0, 0], sizes = [1, 128], strides = [1, 1]} : vector<1x256xf32> to vector<1x128xf32>
    %29 = vector.extract_strided_slice %27 {offsets = [0, 128], sizes = [1, 128], strides = [1, 1]} : vector<1x256xf32> to vector<1x128xf32>
    %30 = vector.extract_strided_slice %16 {offsets = [0, 256], sizes = [1, 128], strides = [1, 1]} : vector<1x384xf32> to vector<1x128xf32>
    %c0_13 = arith.constant 0 : index
    %c0_14 = arith.constant 0 : index
    %31 = vector.load %arg6[%c0_13, %c0_14] : memref<1x128xf32, #tpu.memory_space<vmem>>, vector<1x128xf32>
    %32 = arith.addf %30, %31 : vector<1x128xf32>
    %33 = vector.extract_strided_slice %17 {offsets = [0, 256], sizes = [1, 128], strides = [1, 1]} : vector<1x384xf32> to vector<1x128xf32>
    %c0_15 = arith.constant 0 : index
    %c0_16 = arith.constant 0 : index
    %34 = vector.load %arg7[%c0_15, %c0_16] : memref<1x128xf32, #tpu.memory_space<vmem>>, vector<1x128xf32>
    %35 = arith.addf %33, %34 : vector<1x128xf32>
    %36 = arith.mulf %28, %35 : vector<1x128xf32>
    %37 = arith.addf %32, %36 : vector<1x128xf32>
    %38 = math.tanh %37 : vector<1x128xf32>
    %cst_17 = arith.constant 1.000000e+00 : f32
    %39 = vector.broadcast %cst_17 : f32 to vector<1x128xf32>
    %40 = arith.subf %39, %29 : vector<1x128xf32>
    %41 = arith.mulf %40, %38 : vector<1x128xf32>
    %42 = arith.mulf %29, %12 : vector<1x128xf32>
    %43 = arith.addf %41, %42 : vector<1x128xf32>
    %c1_18 = arith.constant 1 : index
    %c0_19 = arith.constant 0 : index
    %44 = vector.load %arg12[%c1_18, %c0_19] : memref<2x128xf32, #tpu.memory_space<vmem>>, vector<1x128xf32>
    tpu.vector_store %arg12[%c1_18, %c0_19], %43 {strides = array<i32>} : memref<2x128xf32, #tpu.memory_space<vmem>>, vector<1x128xf32>,
    %c0_20 = arith.constant 0 : index
    %c0_21 = arith.constant 0 : index
    %45 = vector.load %arg11[%c0_20, %c0_21] : memref<1x128xf32, #tpu.memory_space<vmem>>, vector<1x128xf32>
    tpu.vector_store %arg11[%c0_20, %c0_21], %43 {strides = array<i32>} : memref<1x128xf32, #tpu.memory_space<vmem>>, vector<1x128xf32>,
    %c0_22 = arith.constant 0 : index
    %c0_23 = arith.constant 0 : index
    %46 = vector.load %arg8[%c0_22, %c0_23] : memref<128x256xf32, #tpu.memory_space<vmem>>, vector<128x256xf32>
    %cst_24 = arith.constant dense<0.000000e+00> : vector<1x256xf32>
    %47 = tpu.matmul %43, %46, %cst_24 {dimension_numbers = #tpu.dot_dimension_numbers<[1], [0], [0], [1], [0, 0, 1, 1], [], []>} : vector<1x128xf32>, vector<128x256xf32>, vector<1x256xf32> -> vector<1x256xf32>
    %c0_25 = arith.constant 0 : index
    %c0_26 = arith.constant 0 : index
    %48 = vector.load %arg9[%c0_25, %c0_26] : memref<1x256xf32, #tpu.memory_space<vmem>>, vector<1x256xf32>
    %49 = arith.addf %47, %48 : vector<1x256xf32>
    %cst_27 = arith.constant dense<0xFF800000> : vector<1xf32>
    %50 = vector.multi_reduction <maximumf>, %49, %cst_27 [1] : vector<1x256xf32> to vector<1xf32>
    %51 = vector.shape_cast %50 : vector<1xf32> to vector<1x1xf32>
    %52 = vector.broadcast %51 : vector<1x1xf32> to vector<1x256xf32>
    %53 = arith.subf %49, %52 : vector<1x256xf32>
    %54 = math.exp %53 : vector<1x256xf32>
    %cst_28 = arith.constant dense<0.000000e+00> : vector<1xf32>
    %55 = vector.multi_reduction <add>, %54, %cst_28 [1] : vector<1x256xf32> to vector<1xf32>
    %56 = vector.shape_cast %55 : vector<1xf32> to vector<1x1xf32>
    %57 = math.log %56 : vector<1x1xf32>
    %58 = arith.addf %57, %51 : vector<1x1xf32>
    %59 = vector.broadcast %58 : vector<1x1xf32> to vector<1x256xf32>
    %60 = arith.subf %49, %59 : vector<1x256xf32>
    %61 = vector.shape_cast %60 : vector<1x256xf32> to vector<1x1x256xf32>
    %c0_29 = arith.constant 0 : index
    %c0_30 = arith.constant 0 : index
    %c0_31 = arith.constant 0 : index
    %62 = vector.load %arg10[%c0_29, %c0_30, %c0_31] : memref<1x1x256xf32, #tpu.memory_space<vmem>>, vector<1x1x256xf32>
    tpu.vector_store %arg10[%c0_29, %c0_30, %c0_31], %61 {strides = array<i32>} : memref<1x1x256xf32, #tpu.memory_space<vmem>>, vector<1x1x256xf32>,
    return
  }
  func.func @transform_0(%arg0: i32, %arg1: memref<8xi32, #tpu.memory_space<smem>>) -> (i32, i32) {
    %c0_i32 = arith.constant 0 : i32
    %c0_i32_0 = arith.constant 0 : i32
    %c0_i32_1 = arith.constant 0 : i32
    return %c0_i32, %c0_i32_0 : i32, i32
  }
  func.func @transform_1(%arg0: i32, %arg1: memref<8xi32, #tpu.memory_space<smem>>) -> (i32, i32) {
    %c0_i32 = arith.constant 0 : i32
    %c0_i32_0 = arith.constant 0 : i32
    %c0_i32_1 = arith.constant 0 : i32
    return %c0_i32, %c0_i32_0 : i32, i32
  }
  func.func @transform_2(%arg0: i32, %arg1: memref<8xi32, #tpu.memory_space<smem>>) -> (i32, i32) {
    %c0_i32 = arith.constant 0 : i32
    %c0_i32_0 = arith.constant 0 : i32
    %c0_i32_1 = arith.constant 0 : i32
    return %c0_i32, %c0_i32_0 : i32, i32
  }
  func.func @transform_3(%arg0: i32, %arg1: memref<8xi32, #tpu.memory_space<smem>>) -> (i32, i32) {
    %c0_i32 = arith.constant 0 : i32
    %c0_i32_0 = arith.constant 0 : i32
    %c0_i32_1 = arith.constant 0 : i32
    return %c0_i32, %c0_i32_0 : i32, i32
  }
  func.func @transform_4(%arg0: i32, %arg1: memref<8xi32, #tpu.memory_space<smem>>) -> (i32, i32) {
    %c0_i32 = arith.constant 0 : i32
    %c0_i32_0 = arith.constant 0 : i32
    %c0_i32_1 = arith.constant 0 : i32
    return %c0_i32, %c0_i32_0 : i32, i32
  }
  func.func @transform_5(%arg0: i32, %arg1: memref<8xi32, #tpu.memory_space<smem>>) -> (i32, i32) {
    %c0_i32 = arith.constant 0 : i32
    %c0_i32_0 = arith.constant 0 : i32
    %c0_i32_1 = arith.constant 0 : i32
    return %c0_i32, %c0_i32_0 : i32, i32
  }
  func.func @transform_6(%arg0: i32, %arg1: memref<8xi32, #tpu.memory_space<smem>>) -> (i32, i32) {
    %c0_i32 = arith.constant 0 : i32
    %c0_i32_0 = arith.constant 0 : i32
    %c0_i32_1 = arith.constant 0 : i32
    return %c0_i32, %c0_i32_0 : i32, i32
  }
  func.func @transform_7(%arg0: i32, %arg1: memref<8xi32, #tpu.memory_space<smem>>) -> (i32, i32) {
    %c0_i32 = arith.constant 0 : i32
    %c0_i32_0 = arith.constant 0 : i32
    %c0_i32_1 = arith.constant 0 : i32
    return %c0_i32, %c0_i32_0 : i32, i32
  }
  func.func @transform_8(%arg0: i32, %arg1: memref<8xi32, #tpu.memory_space<smem>>) -> (i32, i32, i32) {
    %c0_i32 = arith.constant 0 : i32
    %c0_i32_0 = arith.constant 0 : i32
    %c0_i32_1 = arith.constant 0 : i32
    return %arg0, %c0_i32, %c0_i32_0 : i32, i32, i32
  }
  func.func @transform_9(%arg0: i32, %arg1: memref<8xi32, #tpu.memory_space<smem>>) -> (i32, i32) {
    %c0_i32 = arith.constant 0 : i32
    %c0_i32_0 = arith.constant 0 : i32
    %c0_i32_1 = arith.constant 0 : i32
    return %c0_i32, %c0_i32_0 : i32, i32
  }
}

</mosaic_0001>

<llo_original>
// kernel: tpu_custom_call.1
$region0: #{tpu_custom_call.1}
  #allocation0 [shape = 'u32[]', space=smem, size = 0x4, offset = 0x4, fixed_abs, tag = 'smem constant byte address 0x4 - core index']
  #allocation1 [shape = 'u32[72,128]{1,0:T(1,128)}', space=vmem, size = 0x9000, scoped, tag = 'internal scratch']
  #allocation2 [shape = 'f32[2,128]{1,0:T(2,128)}', space=vmem, size = 0x400, scoped, tag = 'scratch operand']
  #allocation3 [shape = 's32[1]{0}', space=sflag, size = 0x4, scoped, tag = 'scoped memory for tpu_custom_call.1']
  #allocation4 [shape = 'u8[512]{0}', space=smem, size = 0x200, scoped, tag = 'prefetched SMEM operand 0']
  %s0 = inlined_call_operand.hbm [shape: s32[8], index: 0, kind: input, shape index: {}]
  %s1 = inlined_call_operand.hbm [shape: f32[256,128], index: 1, kind: input, shape index: {}]
  %s2 = inlined_call_operand.hbm [shape: f32[1,128], index: 2, kind: input, shape index: {}]
  %s3 = inlined_call_operand.hbm [shape: f32[128,768], index: 3, kind: input, shape index: {}]
  %s4 = inlined_call_operand.vmem [shape: f32[1,256], index: 4, kind: input, shape index: {}]
  %s5 = inlined_call_operand.hbm [shape: f32[1,128], index: 5, kind: input, shape index: {}]
  %s6 = inlined_call_operand.vmem [shape: f32[1,128], index: 6, kind: input, shape index: {}]
  %s7 = inlined_call_operand.hbm [shape: f32[128,256], index: 7, kind: input, shape index: {}]
  %s8 = inlined_call_operand.vmem [shape: f32[1,256], index: 8, kind: input, shape index: {}]
  %s9 = inlined_call_operand.hbm [shape: f32[8,1,256], index: 9, kind: output, shape index: {0}]
  %s10 = inlined_call_operand.hbm [shape: f32[1,128], index: 10, kind: output, shape index: {1}]
  %11 = xla_tuple %s9, %s10
  %s12 = sld [smem:[#allocation0]]
  $region97: #{tpu_custom_call.1} parent=0
    _
  %s14 = ssub.s32 1, %s12
  %s15 = scalar_select 0, %s14, %s12
  %s17 = sshll.u32 %s0, 4
  %s18 = int_to_ptr.hbm [resolvable:$true] %s17
  %20 = dma.hbm_to_smem %s18, 16, [#allocation4], [#allocation3]
  %22 = dma.done [#allocation3], 16
  %23 = sfence
  $region1: #{tpu_custom_call.1} parent=0
    #allocation5 [shape = 'u8[131072]{0}', space=vmem, size = 0x20000, scoped, tag = 'input window, operand 1, single buffered']
    #allocation6 [shape = 's32[2]{0}', space=sflag, size = 0x8, scoped, tag = 'scoped memory for tpu_custom_call.1']
    #allocation7 [shape = 's32[2]{0}', space=sflag, size = 0x8, scoped, tag = 'scoped memory for tpu_custom_call.1']
    #allocation8 [shape = 'u8[512]{0}', space=vmem, size = 0x400, scoped, tag = 'input window, operand 2, single buffered']
    #allocation9 [shape = 's32[1]{0}', space=sflag, size = 0x4, scoped, tag = 'scoped memory for tpu_custom_call.1']
    #allocation10 [shape = 'u8[393216]{0}', space=vmem, size = 0x60000, scoped, tag = 'input window, operand 3, single buffered']
    #allocation11 [shape = 'u8[512]{0}', space=vmem, size = 0x400, scoped, tag = 'input window, operand 5, single buffered']
    #allocation12 [shape = 's32[1]{0}', space=sflag, size = 0x4, scoped, tag = 'scoped memory for tpu_custom_call.1']
    #allocation13 [shape = 'u8[131072]{0}', space=vmem, size = 0x20000, scoped, tag = 'input window, operand 7, single buffered']
    #allocation14 [shape = 'u8[2048]{0}', space=vmem, size = 0x800, scoped, tag = 'output window, operand 0']
    #allocation15 [shape = 'u8[512]{0}', space=vmem, size = 0x400, scoped, tag = 'output window, operand 1, single buffered']
    #allocation16 [shape = 's32[1]{0}', space=sflag, size = 0x4, scoped, tag = 'scoped memory for tpu_custom_call.1']
    %24 = vsyncpa [#allocation6], 0
    %25 = vsyncpa [#allocation9], 0
    %26 = vsyncpa [#allocation12], 0
    %27 = vsyncpa [#allocation7], 0
    %s28 = scalar_lea.sflag [#allocation7], 1
    %29 = vsyncpa %s28, 0
    %30 = vsyncpa [#allocation16], 0
    loop: start=0, step=1, limit=10
    $region2: #{tpu_custom_call.1} parent=1 // loop_pre_header
      _
    $region3: #{tpu_custom_call.1} parent=1 // loop_header
      %s32 = sphi 0, %s36
      %p33 = scmp.ge.s32.totalorder %s32, 10
      %s40 = sphi 0, %s40
      %s42 = sphi 0, %s40
      %s43 = sphi 0, %s42
      %s57 = sphi 0, %s43
      %s61 = sphi 0, %s61
      %s63 = sphi 0, %s61
      %s64 = sphi 0, %s63
      %s78 = sphi 0, %s64
      %s82 = sphi 0, %s82
      %s84 = sphi 0, %s82
      %s85 = sphi 0, %s84
      %s99 = sphi 0, %s85
      %s103 = sphi 0, %s103
      %s105 = sphi 0, %s103
      %s106 = sphi 0, %s105
      %s120 = sphi 0, %s106
      %s124 = sphi 0, %s124
      %s126 = sphi 0, %s124
      %s127 = sphi 0, %s126
      %s141 = sphi 0, %s127
      %s145 = sphi 0, %s145
      %s147 = sphi 0, %s145
      %s148 = sphi 0, %s147
      %s162 = sphi 0, %s148
      %s166 = sphi 0, %s166
      %s168 = sphi 0, %s166
      %s169 = sphi 0, %s168
      %s183 = sphi 0, %s169
      %s187 = sphi 0, %s187
      %s189 = sphi 0, %s187
      %s190 = sphi 0, %s189
      %s204 = sphi 0, %s190
      %s210 = sphi 0, %s212
      %s213 = sphi 0, %s210
      %s214 = sphi 0, %s213
      %s230 = sphi 0, %s214
      %s234 = sphi 0, %s234
      %s236 = sphi 0, %s234
      %s237 = sphi 0, %s236
      %s251 = sphi 0, %s237
    $region4: #{tpu_custom_call.1} parent=1 // loop_header_branch
      %35 = sbr.rel (%p33) target = $region8
    $region5: #{tpu_custom_call.1} parent=1 // loop_body
      %s37 = ssub.s32 %s32, 1
      %s38 = ssub.s32 %s32, 2
      %s39 = sadd.s32 %s32, 1
      %s41 = sadd.s32 %s40, 1
      %p44 = scmp.eq.s32.totalorder %s32, 7
      %p45 = scmp.ne.s32.totalorder %s40, %s42
      %p46 = scmp.eq.s32.totalorder %s32, 0
      %p47 = por %p45, %p46
      %p48 = scmp.ne.s32.totalorder %s40, %s42
      %p49 = scmp.eq.s32.totalorder %s37, 7
      %p50 = por %p48, %p49
      %p51 = scmp.ne.s32.totalorder %s42, %s43
      %p52 = scmp.eq.s32.totalorder %s37, 0
      %p53 = por %p51, %p52
      %p54 = scmp.ne.s32.totalorder %s42, %s43
      %p55 = scmp.eq.s32.totalorder %s38, 7
      %p56 = por %p54, %p55
      %p58 = scmp.ne.s32.totalorder %s43, %s57
      %p59 = scmp.eq.s32.totalorder %s38, 0
      %p60 = por %p58, %p59
      %s62 = sadd.s32 %s61, 1
      %p65 = scmp.eq.s32.totalorder %s32, 7
      %p66 = scmp.ne.s32.totalorder %s61, %s63
      %p67 = scmp.eq.s32.totalorder %s32, 0
      %p68 = por %p66, %p67
      %p69 = scmp.ne.s32.totalorder %s61, %s63
      %p70 = scmp.eq.s32.totalorder %s37, 7
      %p71 = por %p69, %p70
      %p72 = scmp.ne.s32.totalorder %s63, %s64
      %p73 = scmp.eq.s32.totalorder %s37, 0
      %p74 = por %p72, %p73
      %p75 = scmp.ne.s32.totalorder %s63, %s64
      %p76 = scmp.eq.s32.totalorder %s38, 7
      %p77 = por %p75, %p76
      %p79 = scmp.ne.s32.totalorder %s64, %s78
      %p80 = scmp.eq.s32.totalorder %s38, 0
      %p81 = por %p79, %p80
      %s83 = sadd.s32 %s82, 1
      %p86 = scmp.eq.s32.totalorder %s32, 7
      %p87 = scmp.ne.s32.totalorder %s82, %s84
      %p88 = scmp.eq.s32.totalorder %s32, 0
      %p89 = por %p87, %p88
      %p90 = scmp.ne.s32.totalorder %s82, %s84
      %p91 = scmp.eq.s32.totalorder %s37, 7
      %p92 = por %p90, %p91
      %p93 = scmp.ne.s32.totalorder %s84, %s85
      %p94 = scmp.eq.s32.totalorder %s37, 0
      %p95 = por %p93, %p94
      %p96 = scmp.ne.s32.totalorder %s84, %s85
      %p97 = scmp.eq.s32.totalorder %s38, 7
      %p98 = por %p96, %p97
      %p100 = scmp.ne.s32.totalorder %s85, %s99
      %p101 = scmp.eq.s32.totalorder %s38, 0
      %p102 = por %p100, %p101
      %s104 = sadd.s32 %s103, 1
      %p107 = scmp.eq.s32.totalorder %s32, 7
      %p108 = scmp.ne.s32.totalorder %s103, %s105
      %p109 = scmp.eq.s32.totalorder %s32, 0
      %p110 = por %p108, %p109
      %p111 = scmp.ne.s32.totalorder %s103, %s105
      %p112 = scmp.eq.s32.totalorder %s37, 7
      %p113 = por %p111, %p112
      %p114 = scmp.ne.s32.totalorder %s105, %s106
      %p115 = scmp.eq.s32.totalorder %s37, 0
      %p116 = por %p114, %p115
      %p117 = scmp.ne.s32.totalorder %s105, %s106
      %p118 = scmp.eq.s32.totalorder %s38, 7
      %p119 = por %p117, %p118
      %p121 = scmp.ne.s32.totalorder %s106, %s120
      %p122 = scmp.eq.s32.totalorder %s38, 0
      %p123 = por %p121, %p122
      %s125 = sadd.s32 %s124, 1
      %p128 = scmp.eq.s32.totalorder %s32, 7
      %p129 = scmp.ne.s32.totalorder %s124, %s126
      %p130 = scmp.eq.s32.totalorder %s32, 0
      %p131 = por %p129, %p130
      %p132 = scmp.ne.s32.totalorder %s124, %s126
      %p133 = scmp.eq.s32.totalorder %s37, 7
      %p134 = por %p132, %p133
      %p135 = scmp.ne.s32.totalorder %s126, %s127
      %p136 = scmp.eq.s32.totalorder %s37, 0
      %p137 = por %p135, %p136
      %p138 = scmp.ne.s32.totalorder %s126, %s127
      %p139 = scmp.eq.s32.totalorder %s38, 7
      %p140 = por %p138, %p139
      %p142 = scmp.ne.s32.totalorder %s127, %s141
      %p143 = scmp.eq.s32.totalorder %s38, 0
      %p144 = por %p142, %p143
      %s146 = sadd.s32 %s145, 1
      %p149 = scmp.eq.s32.totalorder %s32, 7
      %p150 = scmp.ne.s32.totalorder %s145, %s147
      %p151 = scmp.eq.s32.totalorder %s32, 0
      %p152 = por %p150, %p151
      %p153 = scmp.ne.s32.totalorder %s145, %s147
      %p154 = scmp.eq.s32.totalorder %s37, 7
      %p155 = por %p153, %p154
      %p156 = scmp.ne.s32.totalorder %s147, %s148
      %p157 = scmp.eq.s32.totalorder %s37, 0
      %p158 = por %p156, %p157
      %p159 = scmp.ne.s32.totalorder %s147, %s148
      %p160 = scmp.eq.s32.totalorder %s38, 7
      %p161 = por %p159, %p160
      %p163 = scmp.ne.s32.totalorder %s148, %s162
      %p164 = scmp.eq.s32.totalorder %s38, 0
      %p165 = por %p163, %p164
      %s167 = sadd.s32 %s166, 1
      %p170 = scmp.eq.s32.totalorder %s32, 7
      %p171 = scmp.ne.s32.totalorder %s166, %s168
      %p172 = scmp.eq.s32.totalorder %s32, 0
      %p173 = por %p171, %p172
      %p174 = scmp.ne.s32.totalorder %s166, %s168
      %p175 = scmp.eq.s32.totalorder %s37, 7
      %p176 = por %p174, %p175
      %p177 = scmp.ne.s32.totalorder %s168, %s169
      %p178 = scmp.eq.s32.totalorder %s37, 0
      %p179 = por %p177, %p178
      %p180 = scmp.ne.s32.totalorder %s168, %s169
      %p181 = scmp.eq.s32.totalorder %s38, 7
      %p182 = por %p180, %p181
      %p184 = scmp.ne.s32.totalorder %s169, %s183
      %p185 = scmp.eq.s32.totalorder %s38, 0
      %p186 = por %p184, %p185
      %s188 = sadd.s32 %s187, 1
      %p191 = scmp.eq.s32.totalorder %s32, 7
      %p192 = scmp.ne.s32.totalorder %s187, %s189
      %p193 = scmp.eq.s32.totalorder %s32, 0
      %p194 = por %p192, %p193
      %p195 = scmp.ne.s32.totalorder %s187, %s189
      %p196 = scmp.eq.s32.totalorder %s37, 7
      %p197 = por %p195, %p196
      %p198 = scmp.ne.s32.totalorder %s189, %s190
      %p199 = scmp.eq.s32.totalorder %s37, 0
      %p200 = por %p198, %p199
      %p201 = scmp.ne.s32.totalorder %s189, %s190
      %p202 = scmp.eq.s32.totalorder %s38, 7
      %p203 = por %p201, %p202
      %p205 = scmp.ne.s32.totalorder %s190, %s204
      %p206 = scmp.eq.s32.totalorder %s38, 0
      %p207 = por %p205, %p206
      %s208 = ssub.s32 %s32, %s39
      %p209 = scmp.eq.s32.totalorder %s208, 0
      %s211 = sadd.s32 %s210, 1
      %s212 = scalar_select %p209, %s210, %s211
      %p215 = pneg %p209
      %p216 = scmp.eq.s32.totalorder %s32, 7
      %p217 = por %p215, %p216
      %p218 = scmp.ne.s32.totalorder %s210, %s213
      %p219 = scmp.eq.s32.totalorder %s32, 0
      %p220 = por %p218, %p219
      %p221 = scmp.ne.s32.totalorder %s210, %s213
      %p222 = scmp.eq.s32.totalorder %s37, 7
      %p223 = por %p221, %p222
      %p224 = scmp.ne.s32.totalorder %s213, %s214
      %p225 = scmp.eq.s32.totalorder %s37, 0
      %p226 = por %p224, %p225
      %p227 = scmp.ne.s32.totalorder %s213, %s214
      %p228 = scmp.eq.s32.totalorder %s38, 7
      %p229 = por %p227, %p228
      %p231 = scmp.ne.s32.totalorder %s214, %s230
      %p232 = scmp.eq.s32.totalorder %s38, 0
      %p233 = por %p231, %p232
      %s235 = sadd.s32 %s234, 1
      %p238 = scmp.eq.s32.totalorder %s32, 7
      %p239 = scmp.ne.s32.totalorder %s234, %s236
      %p240 = scmp.eq.s32.totalorder %s32, 0
      %p241 = por %p239, %p240
      %p242 = scmp.ne.s32.totalorder %s234, %s236
      %p243 = scmp.eq.s32.totalorder %s37, 7
      %p244 = por %p242, %p243
      %p245 = scmp.ne.s32.totalorder %s236, %s237
      %p246 = scmp.eq.s32.totalorder %s37, 0
      %p247 = por %p245, %p246
      %p248 = scmp.ne.s32.totalorder %s236, %s237
      %p249 = scmp.eq.s32.totalorder %s38, 7
      %p250 = por %p248, %p249
      %p252 = scmp.ne.s32.totalorder %s237, %s251
      %p253 = scmp.eq.s32.totalorder %s38, 0
      %p254 = por %p252, %p253
      %p255 = scmp.le.s32.totalorder 1, %s32
      %p256 = scmp.lt.s32.totalorder %s32, 9
      %p257 = pnand %p255, %p256
      %p258 = pneg %p257
      // Predicated region
      $region9: #{tpu_custom_call.1} parent=5 // pred_check
        _
      $region10: #{tpu_custom_call.1} parent=5 // pred_check_branch
        %260 = sbr.rel (%p257) target = $region12
      $region11: #{tpu_custom_call.1} parent=5 // pred_region
        %s261 = ssub.s32 %s32, 1
        // Predicated region
        $region13: #{tpu_custom_call.1} parent=11 // pred_check
          %p262 = pneg %p53
        $region14: #{tpu_custom_call.1} parent=11 // pred_check_branch
          %264 = sbr.rel (%p262) target = $region16
        $region15: #{tpu_custom_call.1} parent=11 // pred_region
          %266 = vsyncadd [#allocation6], 0
          %s267 = sshll.u32 %s1, 4
          %s268 = int_to_ptr.hbm [resolvable:$true] %s267
          %s269 = sshll.u32 [#allocation5], 4
          %s270 = int_to_ptr.vmem [resolvable:$true] %s269
          %275 = dma.hbm_to_vmem [thread:$0]  %s268, 4096, %s270, [#allocation6], 128, 128, 8
        $region16: #{tpu_custom_call.1} parent=11 // pred_fallthru
          _
        // Predicated region
        $region17: #{tpu_custom_call.1} parent=11 // pred_check
          %p276 = pneg %p74
        $region18: #{tpu_custom_call.1} parent=11 // pred_check_branch
          %278 = sbr.rel (%p276) target = $region20
        $region19: #{tpu_custom_call.1} parent=11 // pred_region
          %280 = vsyncadd [#allocation9], 0
          %s282 = sshll.u32 %s2, 4
          %s283 = int_to_ptr.hbm [resolvable:$true] %s282
          %s284 = sshll.u32 [#allocation8], 4
          %s285 = int_to_ptr.vmem [resolvable:$true] %s284
          %287 = dma.hbm_to_vmem [thread:$0]  %s283, 16, %s285, [#allocation9]
        $region20: #{tpu_custom_call.1} parent=11 // pred_fallthru
          _
        // Predicated region
        $region21: #{tpu_custom_call.1} parent=11 // pred_check
          %p288 = pneg %p95
        $region22: #{tpu_custom_call.1} parent=11 // pred_check_branch
          %290 = sbr.rel (%p288) target = $region24
        $region23: #{tpu_custom_call.1} parent=11 // pred_region
          %292 = vsyncadd [#allocation9], 0
          %s293 = sshll.u32 %s3, 4
          %s294 = int_to_ptr.hbm [resolvable:$true] %s293
          %s295 = sshll.u32 [#allocation10], 4
          %s296 = int_to_ptr.vmem [resolvable:$true] %s295
          %301 = dma.hbm_to_vmem [thread:$0]  %s294, 12288, %s296, [#allocation9], 768, 768, 48
        $region24: #{tpu_custom_call.1} parent=11 // pred_fallthru
          _
        // Predicated region
        $region25: #{tpu_custom_call.1} parent=11 // pred_check
          %p302 = pneg %p116
        $region26: #{tpu_custom_call.1} parent=11 // pred_check_branch
          %304 = sbr.rel (%p302) target = $region28
        $region27: #{tpu_custom_call.1} parent=11 // pred_region
          _
        $region28: #{tpu_custom_call.1} parent=11 // pred_fallthru
          _
        // Predicated region
        $region29: #{tpu_custom_call.1} parent=11 // pred_check
          %p305 = pneg %p137
        $region30: #{tpu_custom_call.1} parent=11 // pred_check_branch
          %307 = sbr.rel (%p305) target = $region32
        $region31: #{tpu_custom_call.1} parent=11 // pred_region
          %309 = vsyncadd [#allocation12], 0
          %s311 = sshll.u32 %s5, 4
          %s312 = int_to_ptr.hbm [resolvable:$true] %s311
          %s313 = sshll.u32 [#allocation11], 4
          %s314 = int_to_ptr.vmem [resolvable:$true] %s313
          %316 = dma.hbm_to_vmem [thread:$0]  %s312, 16, %s314, [#allocation12]
        $region32: #{tpu_custom_call.1} parent=11 // pred_fallthru
          _
        // Predicated region
        $region33: #{tpu_custom_call.1} parent=11 // pred_check
          %p317 = pneg %p158
        $region34: #{tpu_custom_call.1} parent=11 // pred_check_branch
          %319 = sbr.rel (%p317) target = $region36
        $region35: #{tpu_custom_call.1} parent=11 // pred_region
          _
        $region36: #{tpu_custom_call.1} parent=11 // pred_fallthru
          _
        // Predicated region
        $region37: #{tpu_custom_call.1} parent=11 // pred_check
          %p320 = pneg %p179
        $region38: #{tpu_custom_call.1} parent=11 // pred_check_branch
          %322 = sbr.rel (%p320) target = $region40
        $region39: #{tpu_custom_call.1} parent=11 // pred_region
          %324 = vsyncadd [#allocation12], 0
          %s325 = sshll.u32 %s7, 4
          %s326 = int_to_ptr.hbm [resolvable:$true] %s325
          %s327 = sshll.u32 [#allocation13], 4
          %s328 = int_to_ptr.vmem [resolvable:$true] %s327
          %333 = dma.hbm_to_vmem [thread:$0]  %s326, 4096, %s328, [#allocation12], 256, 256, 16
        $region40: #{tpu_custom_call.1} parent=11 // pred_fallthru
          _
        // Predicated region
        $region41: #{tpu_custom_call.1} parent=11 // pred_check
          %p334 = pneg %p200
        $region42: #{tpu_custom_call.1} parent=11 // pred_check_branch
          %336 = sbr.rel (%p334) target = $region44
        $region43: #{tpu_custom_call.1} parent=11 // pred_region
          _
        $region44: #{tpu_custom_call.1} parent=11 // pred_fallthru
          _
      $region12: #{tpu_custom_call.1} parent=5 // pred_fallthru
        _
      %p337 = scmp.lt.s32.totalorder %s32, 8
      // Predicated region
      $region45: #{tpu_custom_call.1} parent=5 // pred_check
        %p338 = pneg %p337
      $region46: #{tpu_custom_call.1} parent=5 // pred_check_branch
        %340 = sbr.rel (%p338) target = $region48
      $region47: #{tpu_custom_call.1} parent=5 // pred_region
        _
      $region48: #{tpu_custom_call.1} parent=5 // pred_fallthru
        _
      %p341 = scmp.le.s32.totalorder 1, %s32
      %p342 = scmp.lt.s32.totalorder %s32, 9
      %p343 = pnand %p341, %p342
      %p344 = pneg %p343
      // Predicated region
      $region49: #{tpu_custom_call.1} parent=5 // pred_check
        _
      $region50: #{tpu_custom_call.1} parent=5 // pred_check_branch
        %346 = sbr.rel (%p343) target = $region52
      $region51: #{tpu_custom_call.1} parent=5 // pred_region
        %s347 = ssub.s32 %s32, 1
        // Predicated region
        $region53: #{tpu_custom_call.1} parent=51 // pred_check
          %p348 = pneg %p53
        $region54: #{tpu_custom_call.1} parent=51 // pred_check_branch
          %350 = sbr.rel (%p348) target = $region56
        $region55: #{tpu_custom_call.1} parent=51 // pred_region
          %352 = dma.done [#allocation6], 4096
        $region56: #{tpu_custom_call.1} parent=51 // pred_fallthru
          _
        // Predicated region
        $region57: #{tpu_custom_call.1} parent=51 // pred_check
          %p353 = pneg %p74
        $region58: #{tpu_custom_call.1} parent=51 // pred_check_branch
          %355 = sbr.rel (%p353) target = $region60
        $region59: #{tpu_custom_call.1} parent=51 // pred_region
          %357 = dma.done [#allocation9], 16
        $region60: #{tpu_custom_call.1} parent=51 // pred_fallthru
          _
        // Predicated region
        $region61: #{tpu_custom_call.1} parent=51 // pred_check
          %p358 = pneg %p95
        $region62: #{tpu_custom_call.1} parent=51 // pred_check_branch
          %360 = sbr.rel (%p358) target = $region64
        $region63: #{tpu_custom_call.1} parent=51 // pred_region
          %362 = dma.done [#allocation9], 12288
        $region64: #{tpu_custom_call.1} parent=51 // pred_fallthru
          _
        // Predicated region
        $region65: #{tpu_custom_call.1} parent=51 // pred_check
          %p363 = pneg %p137
        $region66: #{tpu_custom_call.1} parent=51 // pred_check_branch
          %365 = sbr.rel (%p363) target = $region68
        $region67: #{tpu_custom_call.1} parent=51 // pred_region
          %367 = dma.done [#allocation12], 16
        $region68: #{tpu_custom_call.1} parent=51 // pred_fallthru
          _
        // Predicated region
        $region69: #{tpu_custom_call.1} parent=51 // pred_check
          %p368 = pneg %p179
        $region70: #{tpu_custom_call.1} parent=51 // pred_check_branch
          %370 = sbr.rel (%p368) target = $region72
        $region71: #{tpu_custom_call.1} parent=51 // pred_region
          %372 = dma.done [#allocation12], 4096
        $region72: #{tpu_custom_call.1} parent=51 // pred_fallthru
          _
        %p373 = pneg %p53
        %p374 = pneg %p50
        %p375 = pneg %p74
        %p376 = pneg %p71
        %p377 = pneg %p95
        %p378 = pneg %p92
        %p379 = pneg %p116
        %p380 = pneg %p113
        %p381 = pneg %p137
        %p382 = pneg %p134
        %p383 = pneg %p158
        %p384 = pneg %p155
        %p385 = pneg %p179
        %p386 = pneg %p176
        %p387 = pneg %p200
        %p388 = pneg %p197
        %p389 = pneg %p226
        %p390 = pneg %p223
        %s391 = sand.u32 %s213, 1
        %s392 = scalar_lea.sflag [#allocation7], %s391
        %s393 = sand.u32 %s213, 1
        %s394 = smul.addr %s393, 2
        %s395 = scalar_lea.vmem [#allocation14], %s394
        %p396 = pneg %p247
        %p397 = pneg %p244
        %p398 = scmp.eq.s32.totalorder %s37, 0
        // Predicated region
        $region73: #{tpu_custom_call.1} parent=51 // pred_check
          %p399 = pneg %p398
        $region74: #{tpu_custom_call.1} parent=51 // pred_check_branch
          %401 = sbr.rel (%p399) target = $region76
        $region75: #{tpu_custom_call.1} parent=51 // pred_region
          %v402 = vld [vmem:[#allocation8] sm:$0x1]
          %403 = vst [vmem:[#allocation2 + $0x1] sm:$0x1] %v402
        $region76: #{tpu_custom_call.1} parent=51 // pred_fallthru
          _
        %s404 = sld [smem:[#allocation4 + %s37]]
        %p405 = scmp.gt.s32.totalorder %s404, 0
        %s406 = scalar_select %p405, %s404, 0
        %p407 = scmp.lt.s32.totalorder %s406, 255
        %s408 = scalar_select %p407, %s406, 255
        %s409 = scalar_lea.vmem [#allocation5], %s408
        %v410 = vld [vmem:[%s409] sm:$0x1]
        %v411 = vmax.f32 %v410, 0.0
        %412 = vst [vmem:[#allocation2] sm:$0x1] %v411
        %v413 = vld [vmem:[#allocation2 + $0x1] sm:$0x1]
        %v414 = vld [vmem:[#allocation2] sm:$0x3]
        %v415 = vld [vmem:[#allocation10] sm:$0xff]
        %v416 = vld [vmem:[#allocation10 + $0x8] sm:$0xff]
        %v417 = vld [vmem:[#allocation10 + $0x10] sm:$0xff]
        %v418 = vld [vmem:[#allocation10 + $0x18] sm:$0xff]
        %v419 = vld [vmem:[#allocation10 + $0x20] sm:$0xff]
        %v420 = vld [vmem:[#allocation10 + $0x28] sm:$0xff]
        %v421 = vld [vmem:[#allocation10 + $0x30] sm:$0xff]
        %v422 = vld [vmem:[#allocation10 + $0x38] sm:$0xff]
        %v423 = vld [vmem:[#allocation10 + $0x40] sm:$0xff]
        %v424 = vld [vmem:[#allocation10 + $0x48] sm:$0xff]
        %v425 = vld [vmem:[#allocation10 + $0x50] sm:$0xff]
        %v426 = vld [vmem:[#allocation10 + $0x58] sm:$0xff]
        %v427 = vld [vmem:[#allocation10 + $0x60] sm:$0xff]
        %v428 = vld [vmem:[#allocation10 + $0x68] sm:$0xff]
        %v429 = vld [vmem:[#allocation10 + $0x70] sm:$0xff]
        %v430 = vld [vmem:[#allocation10 + $0x78] sm:$0xff]
        %v431 = vld [vmem:[#allocation10 + $0x80] sm:$0xff]
        %v432 = vld [vmem:[#allocation10 + $0x88] sm:$0xff]
        %v433 = vld [vmem:[#allocation10 + $0x90] sm:$0xff]
        %v434 = vld [vmem:[#allocation10 + $0x98] sm:$0xff]
        %v435 = vld [vmem:[#allocation10 + $0xa0] sm:$0xff]
        %v436 = vld [vmem:[#allocation10 + $0xa8] sm:$0xff]
        %v437 = vld [vmem:[#allocation10 + $0xb0] sm:$0xff]
        %v438 = vld [vmem:[#allocation10 + $0xb8] sm:$0xff]
        %v439 = vld [vmem:[#allocation10 + $0xc0] sm:$0xff]
        %v440 = vld [vmem:[#allocation10 + $0xc8] sm:$0xff]
        %v441 = vld [vmem:[#allocation10 + $0xd0] sm:$0xff]
        %v442 = vld [vmem:[#allocation10 + $0xd8] sm:$0xff]
        %v443 = vld [vmem:[#allocation10 + $0xe0] sm:$0xff]
        %v444 = vld [vmem:[#allocation10 + $0xe8] sm:$0xff]
        %v445 = vld [vmem:[#allocation10 + $0xf0] sm:$0xff]
        %v446 = vld [vmem:[#allocation10 + $0xf8] sm:$0xff]
        %v447 = vld [vmem:[#allocation10 + $0x100] sm:$0xff]
        %v448 = vld [vmem:[#allocation10 + $0x108] sm:$0xff]
        %v449 = vld [vmem:[#allocation10 + $0x110] sm:$0xff]
        %v450 = vld [vmem:[#allocation10 + $0x118] sm:$0xff]
        %v451 = vld [vmem:[#allocation10 + $0x120] sm:$0xff]
        %v452 = vld [vmem:[#allocation10 + $0x128] sm:$0xff]
        %v453 = vld [vmem:[#allocation10 + $0x130] sm:$0xff]
        %v454 = vld [vmem:[#allocation10 + $0x138] sm:$0xff]
        %v455 = vld [vmem:[#allocation10 + $0x140] sm:$0xff]
        %v456 = vld [vmem:[#allocation10 + $0x148] sm:$0xff]
        %v457 = vld [vmem:[#allocation10 + $0x150] sm:$0xff]
        %v458 = vld [vmem:[#allocation10 + $0x158] sm:$0xff]
        %v459 = vld [vmem:[#allocation10 + $0x160] sm:$0xff]
        %v460 = vld [vmem:[#allocation10 + $0x168] sm:$0xff]
        %v461 = vld [vmem:[#allocation10 + $0x170] sm:$0xff]
        %v462 = vld [vmem:[#allocation10 + $0x178] sm:$0xff]
        %v463 = vld [vmem:[#allocation10 + $0x180] sm:$0xff]
        %v464 = vld [vmem:[#allocation10 + $0x188] sm:$0xff]
        %v465 = vld [vmem:[#allocation10 + $0x190] sm:$0xff]
        %v466 = vld [vmem:[#allocation10 + $0x198] sm:$0xff]
        %v467 = vld [vmem:[#allocation10 + $0x1a0] sm:$0xff]
        %v468 = vld [vmem:[#allocation10 + $0x1a8] sm:$0xff]
        %v469 = vld [vmem:[#allocation10 + $0x1b0] sm:$0xff]
        %v470 = vld [vmem:[#allocation10 + $0x1b8] sm:$0xff]
        %v471 = vld [vmem:[#allocation10 + $0x1c0] sm:$0xff]
        %v472 = vld [vmem:[#allocation10 + $0x1c8] sm:$0xff]
        %v473 = vld [vmem:[#allocation10 + $0x1d0] sm:$0xff]
        %v474 = vld [vmem:[#allocation10 + $0x1d8] sm:$0xff]
        %v475 = vld [vmem:[#allocation10 + $0x1e0] sm:$0xff]
        %v476 = vld [vmem:[#allocation10 + $0x1e8] sm:$0xff]
        %v477 = vld [vmem:[#allocation10 + $0x1f0] sm:$0xff]
        %v478 = vld [vmem:[#allocation10 + $0x1f8] sm:$0xff]
        %v479 = vld [vmem:[#allocation10 + $0x200] sm:$0xff]
        %v480 = vld [vmem:[#allocation10 + $0x208] sm:$0xff]
        %v481 = vld [vmem:[#allocation10 + $0x210] sm:$0xff]
        %v482 = vld [vmem:[#allocation10 + $0x218] sm:$0xff]
        %v483 = vld [vmem:[#allocation10 + $0x220] sm:$0xff]
        %v484 = vld [vmem:[#allocation10 + $0x228] sm:$0xff]
        %v485 = vld [vmem:[#allocation10 + $0x230] sm:$0xff]
        %v486 = vld [vmem:[#allocation10 + $0x238] sm:$0xff]
        %v487 = vld [vmem:[#allocation10 + $0x240] sm:$0xff]
        %v488 = vld [vmem:[#allocation10 + $0x248] sm:$0xff]
        %v489 = vld [vmem:[#allocation10 + $0x250] sm:$0xff]
        %v490 = vld [vmem:[#allocation10 + $0x258] sm:$0xff]
        %v491 = vld [vmem:[#allocation10 + $0x260] sm:$0xff]
        %v492 = vld [vmem:[#allocation10 + $0x268] sm:$0xff]
        %v493 = vld [vmem:[#allocation10 + $0x270] sm:$0xff]
        %v494 = vld [vmem:[#allocation10 + $0x278] sm:$0xff]
        %v495 = vld [vmem:[#allocation10 + $0x280] sm:$0xff]
        %v496 = vld [vmem:[#allocation10 + $0x288] sm:$0xff]
        %v497 = vld [vmem:[#allocation10 + $0x290] sm:$0xff]
        %v498 = vld [vmem:[#allocation10 + $0x298] sm:$0xff]
        %v499 = vld [vmem:[#allocation10 + $0x2a0] sm:$0xff]
        %v500 = vld [vmem:[#allocation10 + $0x2a8] sm:$0xff]
        %v501 = vld [vmem:[#allocation10 + $0x2b0] sm:$0xff]
        %v502 = vld [vmem:[#allocation10 + $0x2b8] sm:$0xff]
        %v503 = vld [vmem:[#allocation10 + $0x2c0] sm:$0xff]
        %v504 = vld [vmem:[#allocation10 + $0x2c8] sm:$0xff]
        %v505 = vld [vmem:[#allocation10 + $0x2d0] sm:$0xff]
        %v506 = vld [vmem:[#allocation10 + $0x2d8] sm:$0xff]
        %v507 = vld [vmem:[#allocation10 + $0x2e0] sm:$0xff]
        %v508 = vld [vmem:[#allocation10 + $0x2e8] sm:$0xff]
        %v509 = vld [vmem:[#allocation10 + $0x2f0] sm:$0xff]
        %v510 = vld [vmem:[#allocation10 + $0x2f8] sm:$0xff]
        %511 = vmatpush.msra.mxu0 %v505
        %512 = vmatpush.msra.mxu0 %v499
        %513 = vmatpush.msra.mxu0 %v493
        %514 = vmatpush.msra.mxu0 %v487
        %515 = vmatpush.msra.mxu0 %v481
        %516 = vmatpush.msra.mxu0 %v475
        %517 = vmatpush.msra.mxu0 %v469
        %518 = vmatpush.msra.mxu0 %v463
        %519 = vmatpush.msra.mxu0 %v457
        %520 = vmatpush.msra.mxu0 %v451
        %521 = vmatpush.msra.mxu0 %v445
        %522 = vmatpush.msra.mxu0 %v439
        %523 = vmatpush.msra.mxu0 %v433
        %524 = vmatpush.msra.mxu0 %v427
        %525 = vmatpush.msra.mxu0 %v421
        %526 = vmatpush.msra.mxu0 %v415
        %527 = vmatmul.f32.gmra.mxu0 %v414
        %v528 = vpop.f32.mrf.mxu0
        %v529 = vadd.f32 0.0, %v528
        %530 = vdwg.mxu0
        %531 = vmatpush.msra.mxu0 %v506
        %532 = vmatpush.msra.mxu0 %v500
        %533 = vmatpush.msra.mxu0 %v494
        %534 = vmatpush.msra.mxu0 %v488
        %535 = vmatpush.msra.mxu0 %v482
        %536 = vmatpush.msra.mxu0 %v476
        %537 = vmatpush.msra.mxu0 %v470
        %538 = vmatpush.msra.mxu0 %v464
        %539 = vmatpush.msra.mxu0 %v458
        %540 = vmatpush.msra.mxu0 %v452
        %541 = vmatpush.msra.mxu0 %v446
        %542 = vmatpush.msra.mxu0 %v440
        %543 = vmatpush.msra.mxu0 %v434
        %544 = vmatpush.msra.mxu0 %v428
        %545 = vmatpush.msra.mxu0 %v422
        %546 = vmatpush.msra.mxu0 %v416
        %547 = vmatmul.f32.gmra.mxu0 %v414
        %v548 = vpop.f32.mrf.mxu0
        %v549 = vadd.f32 0.0, %v548
        %550 = vdwg.mxu0
        %551 = vmatpush.msra.mxu0 %v507
        %552 = vmatpush.msra.mxu0 %v501
        %553 = vmatpush.msra.mxu0 %v495
        %554 = vmatpush.msra.mxu0 %v489
        %555 = vmatpush.msra.mxu0 %v483
        %556 = vmatpush.msra.mxu0 %v477
        %557 = vmatpush.msra.mxu0 %v471
        %558 = vmatpush.msra.mxu0 %v465
        %559 = vmatpush.msra.mxu0 %v459
        %560 = vmatpush.msra.mxu0 %v453
        %561 = vmatpush.msra.mxu0 %v447
        %562 = vmatpush.msra.mxu0 %v441
        %563 = vmatpush.msra.mxu0 %v435
        %564 = vmatpush.msra.mxu0 %v429
        %565 = vmatpush.msra.mxu0 %v423
        %566 = vmatpush.msra.mxu0 %v417
        %567 = vmatmul.f32.gmra.mxu0 %v414
        %v568 = vpop.f32.mrf.mxu0
        %v569 = vadd.f32 0.0, %v568
        %570 = vdwg.mxu0
        %571 = vmatpush.msra.mxu0 %v508
        %572 = vmatpush.msra.mxu0 %v502
        %573 = vmatpush.msra.mxu0 %v496
        %574 = vmatpush.msra.mxu0 %v490
        %575 = vmatpush.msra.mxu0 %v484
        %576 = vmatpush.msra.mxu0 %v478
        %577 = vmatpush.msra.mxu0 %v472
        %578 = vmatpush.msra.mxu0 %v466
        %579 = vmatpush.msra.mxu0 %v460
        %580 = vmatpush.msra.mxu0 %v454
        %581 = vmatpush.msra.mxu0 %v448
        %582 = vmatpush.msra.mxu0 %v442
        %583 = vmatpush.msra.mxu0 %v436
        %584 = vmatpush.msra.mxu0 %v430
        %585 = vmatpush.msra.mxu0 %v424
        %586 = vmatpush.msra.mxu0 %v418
        %587 = vmatmul.f32.gmra.mxu0 %v414
        %v588 = vpop.f32.mrf.mxu0
        %v589 = vadd.f32 0.0, %v588
        %590 = vdwg.mxu0
        %591 = vmatpush.msra.mxu0 %v509
        %592 = vmatpush.msra.mxu0 %v503
        %593 = vmatpush.msra.mxu0 %v497
        %594 = vmatpush.msra.mxu0 %v491
        %595 = vmatpush.msra.mxu0 %v485
        %596 = vmatpush.msra.mxu0 %v479
        %597 = vmatpush.msra.mxu0 %v473
        %598 = vmatpush.msra.mxu0 %v467
        %599 = vmatpush.msra.mxu0 %v461
        %600 = vmatpush.msra.mxu0 %v455
        %601 = vmatpush.msra.mxu0 %v449
        %602 = vmatpush.msra.mxu0 %v443
        %603 = vmatpush.msra.mxu0 %v437
        %604 = vmatpush.msra.mxu0 %v431
        %605 = vmatpush.msra.mxu0 %v425
        %606 = vmatpush.msra.mxu0 %v419
        %607 = vmatmul.f32.gmra.mxu0 %v414
        %v608 = vpop.f32.mrf.mxu0
        %v609 = vadd.f32 0.0, %v608
        %610 = vdwg.mxu0
        %611 = vmatpush.msra.mxu0 %v510
        %612 = vmatpush.msra.mxu0 %v504
        %613 = vmatpush.msra.mxu0 %v498
        %614 = vmatpush.msra.mxu0 %v492
        %615 = vmatpush.msra.mxu0 %v486
        %616 = vmatpush.msra.mxu0 %v480
        %617 = vmatpush.msra.mxu0 %v474
        %618 = vmatpush.msra.mxu0 %v468
        %619 = vmatpush.msra.mxu0 %v462
        %620 = vmatpush.msra.mxu0 %v456
        %621 = vmatpush.msra.mxu0 %v450
        %622 = vmatpush.msra.mxu0 %v444
        %623 = vmatpush.msra.mxu0 %v438
        %624 = vmatpush.msra.mxu0 %v432
        %625 = vmatpush.msra.mxu0 %v426
        %626 = vmatpush.msra.mxu0 %v420
        %627 = vmatmul.f32.gmra.mxu0 %v414
        %v628 = vpop.f32.mrf.mxu0
        %v629 = vadd.f32 0.0, %v628
        %630 = vdwg.mxu0
        %v633 = vrot.slane %v589, 1
        %v634 = vrot.slane %v609, 1
        %v637 = vadd.f32 %v529, %v633
        %v638 = vadd.f32 %v549, %v634
        %v639 = vld [vmem:[%s4] sm:$0x3]
        %v641 = vperm.slane %v639, 0
        %v642 = vperm.slane %v639, 1
        %v645 = vadd.f32 %v637, %v641
        %v646 = vadd.f32 %v638, %v642
        %v647 = vxor.u32 %v645, 2147483648
        %v648 = vxor.u32 %v646, 2147483648
        %v649 = vmul.f32 %v647, 1.442695
        %v650 = vpow.pop %v649
        %v651 = vmul.f32 %v648, 1.442695
        %v652 = vpow.pop %v651
        %v653 = vadd.f32 %v650, 1.0
        %v654 = vadd.f32 %v652, 1.0
        %v655 = vrcp.pop %v653
        %v656 = vmul.f32 %v653, %v655
        %v657 = vsub.f32 1.0, %v656
        %v658 = vmul.f32 %v655, %v657
        %v659 = vadd.f32 %v655, %v658
        %vm660 = vweird.f32 %v653
        %vm661 = vweird.f32 %v655
        %vm662 = vmor %vm660, %vm661
        %v663 = vsel %vm662, %v655, %v659
        %v664 = vand.u32 2147483647, %v653
        %vm665 = vcmp.eq.f32.partialorder %v664, 8.507059e+37
        %v666 = vand.u32 %v653, 2147483648
        %v667 = vor.u32 1.1754944e-38, %v666
        %v668 = vsel %vm665, %v667, %v663
        %v669 = vmul.f32 1.0, %v668
        %v670 = vrcp.pop %v654
        %v671 = vmul.f32 %v654, %v670
        %v672 = vsub.f32 1.0, %v671
        %v673 = vmul.f32 %v670, %v672
        %v674 = vadd.f32 %v670, %v673
        %vm675 = vweird.f32 %v654
        %vm676 = vweird.f32 %v670
        %vm677 = vmor %vm675, %vm676
        %v678 = vsel %vm677, %v670, %v674
        %v679 = vand.u32 2147483647, %v654
        %vm680 = vcmp.eq.f32.partialorder %v679, 8.507059e+37
        %v681 = vand.u32 %v654, 2147483648
        %v682 = vor.u32 1.1754944e-38, %v681
        %v683 = vsel %vm680, %v682, %v678
        %v684 = vmul.f32 1.0, %v683
        %v685 = vld [vmem:[#allocation11] sm:$0x1]
        %v686 = vadd.f32 %v569, %v685
        %v687 = vld [vmem:[%s6] sm:$0x1]
        %v689 = vperm.slane %v687, 0
        %v691 = vadd.f32 %v629, %v689
        %v693 = vrot.slane %v691, 1
        %v695 = vmul.f32 %v669, %v693
        %v696 = vadd.f32 %v686, %v695
        %v697 = vtanh.pop %v696
        %v698 = vsub.f32 1.0, %v684
        %v699 = vmul.f32 %v698, %v697
        %v700 = vmul.f32 %v684, %v413
        %v701 = vadd.f32 %v699, %v700
        %702 = vst [vmem:[#allocation2 + $0x1] sm:$0x1] %v701
        %703 = vst [vmem:[#allocation15] sm:$0x1] %v701
        %v704 = vld [vmem:[#allocation13] sm:$0xff]
        %v705 = vld [vmem:[#allocation13 + $0x8] sm:$0xff]
        %v706 = vld [vmem:[#allocation13 + $0x10] sm:$0xff]
        %v707 = vld [vmem:[#allocation13 + $0x18] sm:$0xff]
        %v708 = vld [vmem:[#allocation13 + $0x20] sm:$0xff]
        %v709 = vld [vmem:[#allocation13 + $0x28] sm:$0xff]
        %v710 = vld [vmem:[#allocation13 + $0x30] sm:$0xff]
        %v711 = vld [vmem:[#allocation13 + $0x38] sm:$0xff]
        %v712 = vld [vmem:[#allocation13 + $0x40] sm:$0xff]
        %v713 = vld [vmem:[#allocation13 + $0x48] sm:$0xff]
        %v714 = vld [vmem:[#allocation13 + $0x50] sm:$0xff]
        %v715 = vld [vmem:[#allocation13 + $0x58] sm:$0xff]
        %v716 = vld [vmem:[#allocation13 + $0x60] sm:$0xff]
        %v717 = vld [vmem:[#allocation13 + $0x68] sm:$0xff]
        %v718 = vld [vmem:[#allocation13 + $0x70] sm:$0xff]
        %v719 = vld [vmem:[#allocation13 + $0x78] sm:$0xff]
        %v720 = vld [vmem:[#allocation13 + $0x80] sm:$0xff]
        %v721 = vld [vmem:[#allocation13 + $0x88] sm:$0xff]
        %v722 = vld [vmem:[#allocation13 + $0x90] sm:$0xff]
        %v723 = vld [vmem:[#allocation13 + $0x98] sm:$0xff]
        %v724 = vld [vmem:[#allocation13 + $0xa0] sm:$0xff]
        %v725 = vld [vmem:[#allocation13 + $0xa8] sm:$0xff]
        %v726 = vld [vmem:[#allocation13 + $0xb0] sm:$0xff]
        %v727 = vld [vmem:[#allocation13 + $0xb8] sm:$0xff]
        %v728 = vld [vmem:[#allocation13 + $0xc0] sm:$0xff]
        %v729 = vld [vmem:[#allocation13 + $0xc8] sm:$0xff]
        %v730 = vld [vmem:[#allocation13 + $0xd0] sm:$0xff]
        %v731 = vld [vmem:[#allocation13 + $0xd8] sm:$0xff]
        %v732 = vld [vmem:[#allocation13 + $0xe0] sm:$0xff]
        %v733 = vld [vmem:[#allocation13 + $0xe8] sm:$0xff]
        %v734 = vld [vmem:[#allocation13 + $0xf0] sm:$0xff]
        %v735 = vld [vmem:[#allocation13 + $0xf8] sm:$0xff]
        %v736 = vld [vmem:[%s8] sm:$0x3]
        %v738 = vperm.slane %v736, 0
        %v739 = vperm.slane %v736, 1
        %742 = vmatpush.msra.mxu0 %v734
        %743 = vmatpush.msra.mxu0 %v732
        %744 = vmatpush.msra.mxu0 %v730
        %745 = vmatpush.msra.mxu0 %v728
        %746 = vmatpush.msra.mxu0 %v726
        %747 = vmatpush.msra.mxu0 %v724
        %748 = vmatpush.msra.mxu0 %v722
        %749 = vmatpush.msra.mxu0 %v720
        %750 = vmatpush.msra.mxu0 %v718
        %751 = vmatpush.msra.mxu0 %v716
        %752 = vmatpush.msra.mxu0 %v714
        %753 = vmatpush.msra.mxu0 %v712
        %754 = vmatpush.msra.mxu0 %v710
        %755 = vmatpush.msra.mxu0 %v708
        %756 = vmatpush.msra.mxu0 %v706
        %757 = vmatpush.msra.mxu0 %v704
        %758 = vmatmul.f32.gmra.mxu0 %v701
        %v759 = vpop.f32.mrf.mxu0
        %v760 = vadd.f32 %v738, %v759
        %761 = vdwg.mxu0
        %762 = vmatpush.msra.mxu0 %v735
        %763 = vmatpush.msra.mxu0 %v733
        %764 = vmatpush.msra.mxu0 %v731
        %765 = vmatpush.msra.mxu0 %v729
        %766 = vmatpush.msra.mxu0 %v727
        %767 = vmatpush.msra.mxu0 %v725
        %768 = vmatpush.msra.mxu0 %v723
        %769 = vmatpush.msra.mxu0 %v721
        %770 = vmatpush.msra.mxu0 %v719
        %771 = vmatpush.msra.mxu0 %v717
        %772 = vmatpush.msra.mxu0 %v715
        %773 = vmatpush.msra.mxu0 %v713
        %774 = vmatpush.msra.mxu0 %v711
        %775 = vmatpush.msra.mxu0 %v709
        %776 = vmatpush.msra.mxu0 %v707
        %777 = vmatpush.msra.mxu0 %v705
        %778 = vmatmul.f32.gmra.mxu0 %v701
        %v779 = vpop.f32.mrf.mxu0
        %v780 = vadd.f32 %v739, %v779
        %781 = vdwg.mxu0
        %vm782 = vcmask 1040384
        %v783 = vsel %vm782, %v760, -inf
        %v784 = vsel %vm782, %v780, -inf
        %v785 = vmax.f32 %v783, %v784
        %786 = vmax.xlane.f32.xlu0 %v785
        %v787 = vpop.xlane.xlu0 %786
        %v788 = vsub.f32 %v760, %v787
        %v789 = vsub.f32 %v780, %v787
        %v790 = vmul.f32 %v788, 1.442695
        %v791 = vpow.pop %v790
        %v792 = vmul.f32 %v789, 1.442695
        %v793 = vpow.pop %v792
        %v794 = vsel %vm782, %v791, 0.0
        %v795 = vsel %vm782, %v793, 0.0
        %v796 = vadd.f32 %v794, %v795
        %797 = vadd.xlane.f32.xlu0 %v796
        %v798 = vpop.xlane.xlu0 %797
        %v799 = vlog2.pop %v798
        %v800 = vmul.f32 %v799, 0.6931472
        %v801 = vadd.f32 %v800, %v787
        %v802 = vsub.f32 %v760, %v801
        %v803 = vsub.f32 %v780, %v801
        %v806 = vrot.slane %v803, 7
        %v807 = vsel %vm782, %v802, %v806
        %v809 = vlaneseq
        %vm810 = vcmp.ge.s32.totalorder %v809, 0
        %vm811 = vcmp.lt.s32.totalorder %v809, 256
        %vm812 = vmand %vm810, %vm811
        %813 = vst.msk [vmem:[%s395] sm:$0x3] %vm812, %v807
        %s814 = sand.u32 %s213, 1
        %s815 = scalar_lea.sflag [#allocation7], %s814
        %s816 = sand.u32 %s213, 1
        %s817 = smul.addr %s816, 2
        %s818 = scalar_lea.vmem [#allocation14], %s817
        // Predicated region
        $region77: #{tpu_custom_call.1} parent=51 // pred_check
          %p819 = pneg %p223
        $region78: #{tpu_custom_call.1} parent=51 // pred_check_branch
          %821 = sbr.rel (%p819) target = $region80
        $region79: #{tpu_custom_call.1} parent=51 // pred_region
          %823 = vsyncadd %s815, 0
          %s824 = smul.addr %s37, 2
          %s825 = scalar_lea.hbm %s9, %s824
          %s827 = sshll.u32 %s818, 4
          %s828 = int_to_ptr.vmem [resolvable:$true] %s827
          %s829 = sshll.u32 %s825, 4
          %s830 = int_to_ptr.hbm [resolvable:$true] %s829
          %832 = dma.vmem_to_hbm [thread:$0]  %s828, 32, %s830, %s815
        $region80: #{tpu_custom_call.1} parent=51 // pred_fallthru
          _
        // Predicated region
        $region81: #{tpu_custom_call.1} parent=51 // pred_check
          %p833 = pneg %p244
        $region82: #{tpu_custom_call.1} parent=51 // pred_check_branch
          %835 = sbr.rel (%p833) target = $region84
        $region83: #{tpu_custom_call.1} parent=51 // pred_region
          %837 = vsyncadd [#allocation16], 0
          %s839 = sshll.u32 [#allocation15], 4
          %s840 = int_to_ptr.vmem [resolvable:$true] %s839
          %s841 = sshll.u32 %s10, 4
          %s842 = int_to_ptr.hbm [resolvable:$true] %s841
          %844 = dma.vmem_to_hbm [thread:$0]  %s840, 16, %s842, [#allocation16]
        $region84: #{tpu_custom_call.1} parent=51 // pred_fallthru
          _
        // Predicated region
        $region85: #{tpu_custom_call.1} parent=51 // pred_check
          %p845 = pneg %p244
        $region86: #{tpu_custom_call.1} parent=51 // pred_check_branch
          %847 = sbr.rel (%p845) target = $region88
        $region87: #{tpu_custom_call.1} parent=51 // pred_region
          %849 = dma.done [#allocation16], 16
        $region88: #{tpu_custom_call.1} parent=51 // pred_fallthru
          _
      $region52: #{tpu_custom_call.1} parent=5 // pred_fallthru
        _
      %p850 = scmp.le.s32.totalorder 2, %s32
      // Predicated region
      $region89: #{tpu_custom_call.1} parent=5 // pred_check
        %p851 = pneg %p850
      $region90: #{tpu_custom_call.1} parent=5 // pred_check_branch
        %853 = sbr.rel (%p851) target = $region92
      $region91: #{tpu_custom_call.1} parent=5 // pred_region
        %s854 = ssub.s32 %s32, 2
        // Predicated region
        $region93: #{tpu_custom_call.1} parent=91 // pred_check
          %p855 = pneg %p229
        $region94: #{tpu_custom_call.1} parent=91 // pred_check_branch
          %857 = sbr.rel (%p855) target = $region96
        $region95: #{tpu_custom_call.1} parent=91 // pred_region
          %s858 = sand.u32 %s214, 1
          %s859 = scalar_lea.sflag [#allocation7], %s858
          %s860 = sand.u32 %s214, 1
          %s861 = smul.addr %s860, 2
          %s862 = scalar_lea.vmem [#allocation14], %s861
          %864 = dma.done %s859, 32
        $region96: #{tpu_custom_call.1} parent=91 // pred_fallthru
          _
      $region92: #{tpu_custom_call.1} parent=5 // pred_fallthru
        _
    $region6: #{tpu_custom_call.1} parent=1 // loop_footer
      %s36 = sadd.s32 1, %s32
    $region7: #{tpu_custom_call.1} parent=1 // loop_footer_branch
      %31 = sbr.rel target = $region3
    $region8: #{tpu_custom_call.1} parent=1 // loop_exit
      _
    %865 = vsyncpa [#allocation6], 1
    %s866 = scalar_lea.sflag [#allocation6], 1
    %867 = vsyncpa %s866, 1
    %868 = vsyncpa [#allocation9], 1
    %869 = vsyncpa [#allocation12], 1
    %870 = vsyncpa [#allocation7], 1
    %s871 = scalar_lea.sflag [#allocation7], 1
    %872 = vsyncpa %s871, 1
    %873 = vsyncpa [#allocation16], 1

</llo_original>
